<compile_context>
chip_gen: v7x
topology: tpu7x:2x2x1
jax: 0.10.0
libtpu: 0.0.40
codegen_flags: <defaults>
</compile_context>

<pallas_src>
import copy
import functools
import math

import numpy as np

import jax
import jax.numpy as jnp
from jax import lax
from jax.experimental import pallas as pl
from jax.experimental.pallas import tpu as pltpu


GT_CHUNK = 8  # GT rows handled per grid step (sublane aligned)


# ----------------------------------------------------------------------------
# Fused Pallas kernel: decode predicted boxes + IoU vs one GT chunk.
#   n_gt_ref : (bs,) int32 in SMEM (scalar prefetch)       per-batch GT counts
#   pred_ref : (4, THW)           raw network outputs for one batch / HW tile
#   gt_ref   : (GT_CHUNK, 8)      [min_x, min_y, max_x, max_y, area, 0, 0, 0]
#   out_ref  : (GT_CHUNK, THW)    IoU of every prediction cell vs every GT box
# ----------------------------------------------------------------------------
def _fused_decode_iou_kernel(n_gt_ref, pred_ref, gt_ref, out_ref, *,
                             scale, in_w, in_h, wm, hm, lane_chunk):
    thw = out_ref.shape[-1]
    n_chunks = thw // lane_chunk
    b = pl.program_id(0)
    t = pl.program_id(1)
    g = pl.program_id(2)

    @pl.when(g * GT_CHUNK >= n_gt_ref[b])
    def _():
        # Padded GT chunk for this image: skip all compute. Host ignores rows
        # >= n_gt, but zero the block so no stale VMEM content is written back.
        out_ref[...] = jnp.zeros_like(out_ref)

    @pl.when(g * GT_CHUNK < n_gt_ref[b])
    def _():
        gt = gt_ref[...]                       # (GT_CHUNK, 8), loaded once per step
        b2_min_x = gt[:, 0:1]                  # (GT_CHUNK, 1)
        b2_min_y = gt[:, 1:2]
        b2_max_x = gt[:, 2:3]
        b2_max_y = gt[:, 3:4]
        g_area = gt[:, 4:5]

        step_x = wm / in_w
        step_y = hm / in_h

        def compute_chunk(c, carry):
            off = c * lane_chunk
            start = off if isinstance(off, int) else pl.multiple_of(off, lane_chunk)
            p = pred_ref[:, pl.ds(start, lane_chunk)]           # (4, LC)

            # reference-point grid generated in-kernel (flattened idx = i*W + j)
            idx_i = lax.broadcasted_iota(jnp.int32, (1, lane_chunk), 1) \
                    + (t * thw + start)
            idx = idx_i.astype(jnp.float32)
            i_f = jnp.floor(idx / float(in_w))
            j_f = idx - i_f * float(in_w)
            ref_x = j_f * step_x + step_x * 0.5                 # (1, LC)
            ref_y = i_f * step_y + step_y * 0.5

            # --- decode (same op order as the PyTorch reference) ---
            x0 = p[0:1, :] * scale + ref_x
            y0 = p[1:2, :] * scale + ref_y
            x1 = p[2:3, :] * scale + ref_x
            y1 = p[3:4, :] * scale + ref_y
            w = x1 - x0
            h = y1 - y0
            cx = x0 + w * 0.5
            cy = y0 + h * 0.5
            b1_min_x = cx - w * 0.5
            b1_min_y = cy - h * 0.5
            b1_max_x = cx + w * 0.5
            b1_max_y = cy + h * 0.5
            b1_area = w * h                                     # (1, LC)

            # --- IoU, (GT_CHUNK, 1) x (1, LC) -> (GT_CHUNK, LC) ---
            ix0 = jnp.maximum(b1_min_x, b2_min_x)
            iy0 = jnp.maximum(b1_min_y, b2_min_y)
            ix1 = jnp.minimum(b1_max_x, b2_max_x)
            iy1 = jnp.minimum(b1_max_y, b2_max_y)
            iw = jnp.maximum(ix1 - ix0, 0.0)
            ih = jnp.maximum(iy1 - iy0, 0.0)
            inter = iw * ih
            union = b1_area + g_area - inter
            # Exact divide: pl.reciprocal(approx=True) would offload to the EUP but can
            # flip the host-side dynamic_k = ceil(sum(iou)) at integer boundaries.
            out_ref[:, pl.ds(start, lane_chunk)] = inter / jnp.maximum(union, 1e-6)
            return carry

        if n_chunks == 1:
            compute_chunk(0, None)
        else:
            lax.fori_loop(0, n_chunks, compute_chunk, None,
                          unroll=True if n_chunks <= 8 else 8)


def _choose_thw(hw_pad, tile_hw):
    """Largest lane tile (multiple of 128) <= tile_hw that divides hw_pad, preferring
    >= 2 HW tiles so a genuinely parallel grid axis exists even at bs == 1 (v7x)."""
    n_blk = hw_pad // 128
    max_blk = max(1, min(tile_hw // 128, n_blk))
    want_tiles = 2 if n_blk >= 2 else 1
    for cand in range(max_blk, 0, -1):
        if n_blk % cand == 0 and (n_blk // cand) >= want_tiles:
            return cand * 128
    return 128


def _choose_lane_chunk(thw):
    for c in (512, 256, 128):
        if thw % c == 0:
            return c
    return 128


def fused_decode_iou(pred_nchw, gt_dec, n_gt, *, scale, model_input_size, tile_hw=8192):
    """pred_nchw: (bs, 4, H, W) f32; gt_dec: (bs, MAX_GT, 8) f32 decomposed GT;
    n_gt: (bs,) int32 real GT counts.  Returns IoU maps (bs, MAX_GT, H*W) f32."""
    bs, c, H, W = pred_nchw.shape
    assert c == 4
    _, max_gt, gdim = gt_dec.shape
    assert max_gt % GT_CHUNK == 0 and gdim == 8

    HW = H * W
    HW_pad = ((HW + 127) // 128) * 128
    pred_flat = pred_nchw.reshape(bs, 4, HW)
    if HW_pad != HW:  # avoid the extra HBM copy whenever HW is already lane-aligned
        pred_flat = jnp.pad(pred_flat, ((0, 0), (0, 0), (0, HW_pad - HW)))

    thw = _choose_thw(HW_pad, tile_hw)
    lane_chunk = _choose_lane_chunk(thw)
    hw_tiles = HW_pad // thw
    gt_chunks = max_gt // GT_CHUNK
    # GT-chunk axis innermost -> pred block index is constant across it (no refetch).
    grid = (bs, hw_tiles, gt_chunks)

    kernel = functools.partial(
        _fused_decode_iou_kernel,
        scale=float(scale), in_w=W, in_h=H,
        wm=float(model_input_size[0]), hm=float(model_input_size[1]),
        lane_chunk=lane_chunk)

    out = pl.pallas_call(
        kernel,
        out_shape=jax.ShapeDtypeStruct((bs, max_gt, HW_pad), jnp.float32),
        grid_spec=pltpu.PrefetchScalarGridSpec(
            num_scalar_prefetch=1,
            grid=grid,
            in_specs=[
                pl.BlockSpec((None, 4, thw), lambda b, t, g, n: (b, 0, t)),
                pl.BlockSpec((None, GT_CHUNK, 8), lambda b, t, g, n: (b, g, 0)),
            ],
            out_specs=pl.BlockSpec((None, GT_CHUNK, thw), lambda b, t, g, n: (b, g, t)),
        ),
        compiler_params=pltpu.CompilerParams(
            dimension_semantics=("parallel", "parallel", "parallel"),
            vmem_limit_bytes=32 * 1024 * 1024),
    )(n_gt, pred_flat, gt_dec)

    # trim the lane padding on device before the (single) device->host copy
    return out[:, :, :HW]


# ----------------------------------------------------------------------------
# Host-side helpers (exact replication of the PyTorch reference semantics)
# ----------------------------------------------------------------------------
def min_max_ref_point_index(bbox, output_feature, model_input_size):
    min_x = bbox[0] - bbox[2] / 2
    min_y = bbox[1] - bbox[3] / 2
    max_x = bbox[0] + bbox[2] / 2
    max_y = bbox[1] + bbox[3] / 2
    min_wight_index = math.floor(max(min_x * output_feature[0] / model_input_size[0] - 1 / 2, 0))
    min_height_index = math.floor(max(min_y * output_feature[1] / model_input_size[1] - 1 / 2, 0))
    max_wight_index = math.ceil(min(max_x * output_feature[0] / model_input_size[0] - 1 / 2,
                                    output_feature[0] - 1))
    max_height_index = math.ceil(min(max_y * output_feature[1] / model_input_size[1] - 1 / 2,
                                     output_feature[1] - 1))
    return (min_wight_index, min_height_index, max_wight_index, max_height_index)


def getSPL_SampleWeight(sample_score, spl_threshold, m):
    if sample_score >= spl_threshold:
        return sample_score ** m
    else:
        return 0


# TODO(synk): the dynamic-k selection / dict-based tie-breaking / label-map scatter is
# data-dependent sequential control flow with no clean Pallas equivalent; it is kept
# on host (NumPy) and consumes the Pallas-computed IoU maps.
def _assign_targets(iou_maps, bboxes_xywh, out_feature_size, model_input_size,
                    num_classes, difficult_mode, spl_threshold, m):
    Wf = int(out_feature_size[0])
    Hf = int(out_feature_size[1])
    class_label_map = np.array(([1.0] + [0.0] * (num_classes - 1)) * Wf * Hf)
    points_label_map = np.array([1.0] * 6 * Wf * Hf)

    if len(bboxes_xywh) == 0:
        return (class_label_map.reshape(1, Hf, Wf, -1),
                points_label_map.reshape(1, Hf, Wf, -1))

    position_iou_value_dic = {}
    for bi, bbox in enumerate(bboxes_xywh):
        obj_area = bbox[2] * bbox[3]
        if obj_area == 0:
            continue
        iou = iou_maps[bi].astype(np.float64)

        first_filter = np.array([0.0] * Wf * Hf)
        miw, mih, maw, mah = min_max_ref_point_index(bbox, out_feature_size, model_input_size)
        for i in range(mih, mah + 1):
            for j in range(miw, maw + 1):
                first_filter[i * Wf + j] = 1
        first_filter = first_filter.reshape(Hf, Wf)

        iou_filter = iou * first_filter
        dynamic_k = np.sum(iou_filter)
        if dynamic_k < 1:
            dynamic_k = 1
        dynamic_k = math.ceil(dynamic_k)

        dropout_iou = copy.deepcopy(iou_filter).reshape(-1)
        sorted_iou = np.sort(dropout_iou)
        second_filter_index = iou_filter <= sorted_iou[-(dynamic_k + 1)]
        iou_filter[second_filter_index] = 0

        if difficult_mode == 0:
            sample_weight = 1
        elif difficult_mode == 1:
            sample_weight = 1 if bbox[5] >= 0.625 else 0
        elif difficult_mode == 2:
            sample_weight = getSPL_SampleWeight(bbox[5], spl_threshold, m)
        elif difficult_mode == 3:
            sample_weight = bbox[5]
        else:
            raise ValueError("Error! difficult_mode error.")

        lamda = (1 / dynamic_k) ** (1 / 2)
        for i in range(mih, mah + 1):
            for j in range(miw, maw + 1):
                if iou_filter[i][j] > 0:
                    if (i, j) in position_iou_value_dic:
                        if iou_filter[i][j] < position_iou_value_dic[i, j]:
                            continue
                        elif iou_filter[i][j] == position_iou_value_dic[i, j]:
                            for c in range(num_classes):
                                class_label_map[(i * Wf + j) * num_classes + c] = 0
                            continue
                        else:
                            position_iou_value_dic[i, j] = iou_filter[i][j]
                            for c in range(num_classes):
                                class_label_map[(i * Wf + j) * num_classes + c] = 0
                    else:
                        position_iou_value_dic[i, j] = iou_filter[i][j]
                    class_label_map[(i * Wf + j) * num_classes + 0] = 0
                    class_label_map[(i * Wf + j) * num_classes + int(bbox[4]) + 1] = 1
                    base = (i * Wf + j) * 6
                    points_label_map[base + 0] = bbox[0]
                    points_label_map[base + 1] = bbox[1]
                    points_label_map[base + 2] = bbox[2]
                    points_label_map[base + 3] = bbox[3]
                    points_label_map[base + 4] = sample_weight
                    points_label_map[base + 5] = lamda
                else:
                    class_label_map[(i * Wf + j) * num_classes + 0] = 0

    return (class_label_map.reshape(1, Hf, Wf, -1),
            points_label_map.reshape(1, Hf, Wf, -1))


# ----------------------------------------------------------------------------
# getTargets equivalent
# ----------------------------------------------------------------------------
class GetTargetsPallas:
    def __init__(self, model_input_size, num_classes=2, scale=80.0, m=3, stride=2):
        self.model_input_size = model_input_size
        self.num_classes = num_classes
        self.scale = scale
        self.m = m
        self.out_feature_size = [model_input_size[0] / stride, model_input_size[1] / stride]

    def __call__(self, inputs, bboxes_bs, difficult_mode, spl_threshold=None):
        feat, pred = inputs                       # feat: (bs, C, H, W)  pred: (bs, 4, H, W)
        bs, _, in_h, in_w = feat.shape

        # ---- host: xyxy -> xywh conversion (same in-place order as the reference) ----
        bb_list = []
        for b in range(bs):
            bb = np.asarray(bboxes_bs[b], dtype=np.float64)
            if bb.size > 0:
                bb = bb.copy()
                bb[:, 2] = bb[:, 2] - bb[:, 0]
                bb[:, 3] = bb[:, 3] - bb[:, 1]
                bb[:, 0] = bb[:, 0] + bb[:, 2] / 2
                bb[:, 1] = bb[:, 1] + bb[:, 3] / 2
            else:
                bb = np.zeros((0, 6), dtype=np.float64)
            bb_list.append(bb)

        # GT padded to a fixed bucket (multiple of 8) + pre-decomposed on host to
        # [min_x, min_y, max_x, max_y, area, 0, 0, 0] in float32 (same op order as
        # boxes_iou on the float32 GT tensor).
        max_n = max([bb.shape[0] for bb in bb_list] + [0])
        max_gt = max(GT_CHUNK, ((max_n + GT_CHUNK - 1) // GT_CHUNK) * GT_CHUNK)
        gt_dec = np.zeros((bs, max_gt, 8), dtype=np.float32)
        n_gt = np.zeros((bs,), dtype=np.int32)
        for b, bb in enumerate(bb_list):
            n = bb.shape[0]
            n_gt[b] = n
            if n:
                g32 = bb[:, :4].astype(np.float32)
                half_w = g32[:, 2] / np.float32(2.0)
                half_h = g32[:, 3] / np.float32(2.0)
                gt_dec[b, :n, 0] = g32[:, 0] - half_w
                gt_dec[b, :n, 1] = g32[:, 1] - half_h
                gt_dec[b, :n, 2] = g32[:, 0] + half_w
                gt_dec[b, :n, 3] = g32[:, 1] + half_h
                gt_dec[b, :n, 4] = g32[:, 2] * g32[:, 3]

        # ---- single fused Pallas call + single (trimmed) device->host copy ----
        iou_dev = fused_decode_iou(
            jnp.asarray(pred, dtype=jnp.float32),
            jnp.asarray(gt_dec), jnp.asarray(n_gt),
            scale=self.scale, model_input_size=self.model_input_size)
        iou_all = np.asarray(jax.block_until_ready(iou_dev))   # (bs, MAX_GT, H*W)

        targets_cls, targets_loc = [], []
        for b in range(bs):
            bb = bb_list[b]
            n = bb.shape[0]
            iou_maps = iou_all[b, :n].reshape(n, in_h, in_w)
            cls_map, loc_map = _assign_targets(
                iou_maps, bb, self.out_feature_size, self.model_input_size,
                self.num_classes, difficult_mode, spl_threshold, self.m)
            targets_cls.append(cls_map)
            targets_loc.append(loc_map)

        targets = [np.concatenate(targets_cls, 0), np.concatenate(targets_loc, 0)]
        return targets


if __name__ == "__main__":
    key = jax.random.PRNGKey(0)
    k1, k2 = jax.random.split(key)

    bs, H, W = 2, 16, 16
    model_input_size = (32, 32)   # stride=2 -> out_feature_size = (16, 16) == (W, H)

    feat = jax.random.normal(k1, (bs, 4, H, W), dtype=jnp.float32)
    # small offsets so decoded widths/heights are positive
    pred = jax.random.uniform(k2, (bs, 4, H, W), dtype=jnp.float32, minval=0.0, maxval=0.1)
    pred = pred.at[:, 0:2].multiply(-1.0)

    bboxes_bs = [
        np.array([[4.0, 4.0, 20.0, 20.0, 0.0, 0.9],
                  [10.0, 12.0, 28.0, 30.0, 1.0, 0.7]], dtype=np.float64),
        np.array([[2.0, 6.0, 18.0, 26.0, 1.0, 0.8]], dtype=np.float64),
    ]

    model = GetTargetsPallas(model_input_size, num_classes=2, scale=80.0, m=3, stride=2)
    targets = model([feat, pred], bboxes_bs, difficult_mode=0)

    assert targets[0].shape == (bs, H, W, 2) and targets[0].dtype == np.float64
    assert targets[1].shape == (bs, H, W, 6) and targets[1].dtype == np.float64
    assert np.isfinite(targets[0]).all() and np.isfinite(targets[1]).all()
    print("KERNEL_OK")
</pallas_src>

<mosaic_0001>
module attributes {stable_mosaic.version = 11 : i64} {
  func.func @_fused_decode_iou_kernel(%arg0: i32, %arg1: i32, %arg2: i32, %arg3: memref<2xi32, #tpu.memory_space<smem>>, %arg4: memref<1x4x128xf32, #tpu.memory_space<vmem>>, %arg5: memref<1x8x8xf32, #tpu.memory_space<vmem>>, %arg6: memref<1x8x128xf32, #tpu.memory_space<vmem>>) attributes {dimension_semantics = [#tpu.dimension_semantics<parallel>, #tpu.dimension_semantics<parallel>, #tpu.dimension_semantics<parallel>], iteration_bounds = array<i64: 2, 2, 1>, scalar_prefetch = 1 : i64, scratch_operands = 0 : i64, tpu.core_type = #tpu.core_type<tc>, window_params = [{transform_indices = @transform_0, window_bounds = array<i64: 1, 4, 128>}, {transform_indices = @transform_1, window_bounds = array<i64: 1, 8, 8>}, {transform_indices = @transform_2, window_bounds = array<i64: 1, 8, 128>}]} {
    %c8_i32 = arith.constant 8 : i32
    %0 = arith.muli %arg2, %c8_i32 : i32
    %1 = arith.index_cast %arg0 : i32 to index
    %2 = memref.load %arg3[%1] : memref<2xi32, #tpu.memory_space<smem>>
    %3 = arith.cmpi sge, %0, %2 : i32
    %4 = arith.extui %3 : i1 to i32
    %c0_i32 = arith.constant 0 : i32
    %5 = arith.cmpi ne, %4, %c0_i32 : i32
    scf.if %5 {
      %cst = arith.constant 0.000000e+00 : f32
      %12 = vector.broadcast %cst : f32 to vector<8x128xf32>
      %c0 = arith.constant 0 : index
      %c0_2 = arith.constant 0 : index
      %c0_3 = arith.constant 0 : index
      %13 = vector.load %arg6[%c0, %c0_2, %c0_3] : memref<1x8x128xf32, #tpu.memory_space<vmem>>, vector<1x8x128xf32>
      %14 = vector.shape_cast %13 : vector<1x8x128xf32> to vector<8x128xf32>
      %15 = vector.shape_cast %12 : vector<8x128xf32> to vector<1x8x128xf32>
      tpu.vector_store %arg6[%c0, %c0_2, %c0_3], %15 {strides = array<i32>} : memref<1x8x128xf32, #tpu.memory_space<vmem>>, vector<1x8x128xf32>,
    } else {
    }
    %c8_i32_0 = arith.constant 8 : i32
    %6 = arith.muli %arg2, %c8_i32_0 : i32
    %7 = arith.index_cast %arg0 : i32 to index
    %8 = memref.load %arg3[%7] : memref<2xi32, #tpu.memory_space<smem>>
    %9 = arith.cmpi slt, %6, %8 : i32
    %10 = arith.extui %9 : i1 to i32
    %c0_i32_1 = arith.constant 0 : i32
    %11 = arith.cmpi ne, %10, %c0_i32_1 : i32
    scf.if %11 {
      %c0 = arith.constant 0 : index
      %c0_2 = arith.constant 0 : index
      %c0_3 = arith.constant 0 : index
      %12 = vector.load %arg5[%c0, %c0_2, %c0_3] : memref<1x8x8xf32, #tpu.memory_space<vmem>>, vector<1x8x8xf32>
      %13 = vector.shape_cast %12 : vector<1x8x8xf32> to vector<8x8xf32>
      %14 = vector.extract_strided_slice %13 {offsets = [0, 0], sizes = [8, 1], strides = [1, 1]} : vector<8x8xf32> to vector<8x1xf32>
      %15 = vector.extract_strided_slice %13 {offsets = [0, 1], sizes = [8, 1], strides = [1, 1]} : vector<8x8xf32> to vector<8x1xf32>
      %16 = vector.extract_strided_slice %13 {offsets = [0, 2], sizes = [8, 1], strides = [1, 1]} : vector<8x8xf32> to vector<8x1xf32>
      %17 = vector.extract_strided_slice %13 {offsets = [0, 3], sizes = [8, 1], strides = [1, 1]} : vector<8x8xf32> to vector<8x1xf32>
      %18 = vector.extract_strided_slice %13 {offsets = [0, 4], sizes = [8, 1], strides = [1, 1]} : vector<8x8xf32> to vector<8x1xf32>
      %c0_4 = arith.constant 0 : index
      %c0_5 = arith.constant 0 : index
      %c0_6 = arith.constant 0 : index
      %19 = vector.load %arg4[%c0_4, %c0_5, %c0_6] : memref<1x4x128xf32, #tpu.memory_space<vmem>>, vector<1x4x128xf32>
      %20 = vector.shape_cast %19 : vector<1x4x128xf32> to vector<4x128xf32>
      %21 = tpu.iota {dimensions = array<i32: 1>} : vector<1x128xi32>
      %c128_i32 = arith.constant 128 : i32
      %22 = arith.muli %arg1, %c128_i32 : i32
      %c0_i32_7 = arith.constant 0 : i32
      %23 = arith.addi %22, %c0_i32_7 : i32
      %24 = vector.broadcast %23 : i32 to vector<1x128xi32>
      %25 = arith.addi %21, %24 : vector<1x128xi32>
      %26 = arith.sitofp %25 : vector<1x128xi32> to vector<1x128xf32>
      %cst = arith.constant 1.600000e+01 : f32
      %27 = vector.broadcast %cst : f32 to vector<1x128xf32>
      %28 = arith.divf %26, %27 : vector<1x128xf32>
      %29 = math.floor %28 : vector<1x128xf32>
      %cst_8 = arith.constant 1.600000e+01 : f32
      %30 = vector.broadcast %cst_8 : f32 to vector<1x128xf32>
      %31 = arith.mulf %29, %30 : vector<1x128xf32>
      %32 = arith.subf %26, %31 : vector<1x128xf32>
      %cst_9 = arith.constant 2.000000e+00 : f32
      %33 = vector.broadcast %cst_9 : f32 to vector<1x128xf32>
      %34 = arith.mulf %32, %33 : vector<1x128xf32>
      %cst_10 = arith.constant 1.000000e+00 : f32
      %35 = vector.broadcast %cst_10 : f32 to vector<1x128xf32>
      %36 = arith.addf %34, %35 : vector<1x128xf32>
      %cst_11 = arith.constant 2.000000e+00 : f32
      %37 = vector.broadcast %cst_11 : f32 to vector<1x128xf32>
      %38 = arith.mulf %29, %37 : vector<1x128xf32>
      %cst_12 = arith.constant 1.000000e+00 : f32
      %39 = vector.broadcast %cst_12 : f32 to vector<1x128xf32>
      %40 = arith.addf %38, %39 : vector<1x128xf32>
      %41 = vector.extract_strided_slice %20 {offsets = [0, 0], sizes = [1, 128], strides = [1, 1]} : vector<4x128xf32> to vector<1x128xf32>
      %cst_13 = arith.constant 8.000000e+01 : f32
      %42 = vector.broadcast %cst_13 : f32 to vector<1x128xf32>
      %43 = arith.mulf %41, %42 : vector<1x128xf32>
      %44 = arith.addf %43, %36 : vector<1x128xf32>
      %45 = vector.extract_strided_slice %20 {offsets = [1, 0], sizes = [1, 128], strides = [1, 1]} : vector<4x128xf32> to vector<1x128xf32>
      %cst_14 = arith.constant 8.000000e+01 : f32
      %46 = vector.broadcast %cst_14 : f32 to vector<1x128xf32>
      %47 = arith.mulf %45, %46 : vector<1x128xf32>
      %48 = arith.addf %47, %40 : vector<1x128xf32>
      %49 = vector.extract_strided_slice %20 {offsets = [2, 0], sizes = [1, 128], strides = [1, 1]} : vector<4x128xf32> to vector<1x128xf32>
      %cst_15 = arith.constant 8.000000e+01 : f32
      %50 = vector.broadcast %cst_15 : f32 to vector<1x128xf32>
      %51 = arith.mulf %49, %50 : vector<1x128xf32>
      %52 = arith.addf %51, %36 : vector<1x128xf32>
      %53 = vector.extract_strided_slice %20 {offsets = [3, 0], sizes = [1, 128], strides = [1, 1]} : vector<4x128xf32> to vector<1x128xf32>
      %cst_16 = arith.constant 8.000000e+01 : f32
      %54 = vector.broadcast %cst_16 : f32 to vector<1x128xf32>
      %55 = arith.mulf %53, %54 : vector<1x128xf32>
      %56 = arith.addf %55, %40 : vector<1x128xf32>
      %57 = arith.subf %52, %44 : vector<1x128xf32>
      %58 = arith.subf %56, %48 : vector<1x128xf32>
      %cst_17 = arith.constant 5.000000e-01 : f32
      %59 = vector.broadcast %cst_17 : f32 to vector<1x128xf32>
      %60 = arith.mulf %57, %59 : vector<1x128xf32>
      %61 = arith.addf %44, %60 : vector<1x128xf32>
      %cst_18 = arith.constant 5.000000e-01 : f32
      %62 = vector.broadcast %cst_18 : f32 to vector<1x128xf32>
      %63 = arith.mulf %58, %62 : vector<1x128xf32>
      %64 = arith.addf %48, %63 : vector<1x128xf32>
      %cst_19 = arith.constant 5.000000e-01 : f32
      %65 = vector.broadcast %cst_19 : f32 to vector<1x128xf32>
      %66 = arith.mulf %57, %65 : vector<1x128xf32>
      %67 = arith.subf %61, %66 : vector<1x128xf32>
      %cst_20 = arith.constant 5.000000e-01 : f32
      %68 = vector.broadcast %cst_20 : f32 to vector<1x128xf32>
      %69 = arith.mulf %58, %68 : vector<1x128xf32>
      %70 = arith.subf %64, %69 : vector<1x128xf32>
      %cst_21 = arith.constant 5.000000e-01 : f32
      %71 = vector.broadcast %cst_21 : f32 to vector<1x128xf32>
      %72 = arith.mulf %57, %71 : vector<1x128xf32>
      %73 = arith.addf %61, %72 : vector<1x128xf32>
      %cst_22 = arith.constant 5.000000e-01 : f32
      %74 = vector.broadcast %cst_22 : f32 to vector<1x128xf32>
      %75 = arith.mulf %58, %74 : vector<1x128xf32>
      %76 = arith.addf %64, %75 : vector<1x128xf32>
      %77 = arith.mulf %57, %58 : vector<1x128xf32>
      %78 = vector.broadcast %67 : vector<1x128xf32> to vector<8x128xf32>
      %79 = vector.broadcast %14 : vector<8x1xf32> to vector<8x128xf32>
      %80 = arith.maximumf %78, %79 : vector<8x128xf32>
      %81 = vector.broadcast %70 : vector<1x128xf32> to vector<8x128xf32>
      %82 = vector.broadcast %15 : vector<8x1xf32> to vector<8x128xf32>
      %83 = arith.maximumf %81, %82 : vector<8x128xf32>
      %84 = vector.broadcast %73 : vector<1x128xf32> to vector<8x128xf32>
      %85 = vector.broadcast %16 : vector<8x1xf32> to vector<8x128xf32>
      %86 = arith.minimumf %84, %85 : vector<8x128xf32>
      %87 = vector.broadcast %76 : vector<1x128xf32> to vector<8x128xf32>
      %88 = vector.broadcast %17 : vector<8x1xf32> to vector<8x128xf32>
      %89 = arith.minimumf %87, %88 : vector<8x128xf32>
      %90 = arith.subf %86, %80 : vector<8x128xf32>
      %cst_23 = arith.constant 0.000000e+00 : f32
      %91 = vector.broadcast %cst_23 : f32 to vector<8x128xf32>
      %92 = arith.maximumf %90, %91 : vector<8x128xf32>
      %93 = arith.subf %89, %83 : vector<8x128xf32>
      %cst_24 = arith.constant 0.000000e+00 : f32
      %94 = vector.broadcast %cst_24 : f32 to vector<8x128xf32>
      %95 = arith.maximumf %93, %94 : vector<8x128xf32>
      %96 = arith.mulf %92, %95 : vector<8x128xf32>
      %97 = vector.broadcast %77 : vector<1x128xf32> to vector<8x128xf32>
      %98 = vector.broadcast %18 : vector<8x1xf32> to vector<8x128xf32>
      %99 = arith.addf %97, %98 : vector<8x128xf32>
      %100 = arith.subf %99, %96 : vector<8x128xf32>
      %cst_25 = arith.constant 9.99999997E-7 : f32
      %101 = vector.broadcast %cst_25 : f32 to vector<8x128xf32>
      %102 = arith.maximumf %100, %101 : vector<8x128xf32>
      %103 = arith.divf %96, %102 : vector<8x128xf32>
      %c0_26 = arith.constant 0 : index
      %c0_27 = arith.constant 0 : index
      %c0_28 = arith.constant 0 : index
      %104 = vector.load %arg6[%c0_26, %c0_27, %c0_28] : memref<1x8x128xf32, #tpu.memory_space<vmem>>, vector<1x8x128xf32>
      %105 = vector.shape_cast %104 : vector<1x8x128xf32> to vector<8x128xf32>
      %106 = vector.shape_cast %103 : vector<8x128xf32> to vector<1x8x128xf32>
      tpu.vector_store %arg6[%c0_26, %c0_27, %c0_28], %106 {strides = array<i32>} : memref<1x8x128xf32, #tpu.memory_space<vmem>>, vector<1x8x128xf32>,
    } else {
    }
    return
  }
  func.func @transform_0(%arg0: i32, %arg1: i32, %arg2: i32, %arg3: memref<2xi32, #tpu.memory_space<smem>>) -> (i32, i32, i32) {
    %c0_i32 = arith.constant 0 : i32
    %c0_i32_0 = arith.constant 0 : i32
    return %arg0, %c0_i32, %arg1 : i32, i32, i32
  }
  func.func @transform_1(%arg0: i32, %arg1: i32, %arg2: i32, %arg3: memref<2xi32, #tpu.memory_space<smem>>) -> (i32, i32, i32) {
    %c0_i32 = arith.constant 0 : i32
    %c0_i32_0 = arith.constant 0 : i32
    return %arg0, %arg2, %c0_i32 : i32, i32, i32
  }
  func.func @transform_2(%arg0: i32, %arg1: i32, %arg2: i32, %arg3: memref<2xi32, #tpu.memory_space<smem>>) -> (i32, i32, i32) {
    %c0_i32 = arith.constant 0 : i32
    return %arg0, %arg2, %arg1 : i32, i32, i32
  }
}

</mosaic_0001>

<llo_original>
// kernel: tpu_custom_call.1
$region0: #{tpu_custom_call.1}
  #allocation0 [shape = 'u32[]', space=smem, size = 0x4, offset = 0x4, fixed_abs, tag = 'smem constant byte address 0x4 - core index']
  #allocation1 [shape = 'u32[144,128]{1,0:T(1,128)}', space=vmem, size = 0x12000, scoped, tag = 'internal scratch']
  #allocation2 [shape = 's32[1]{0}', space=sflag, size = 0x4, scoped, tag = 'scoped memory for tpu_custom_call.1']
  #allocation3 [shape = 'u8[512]{0}', space=smem, size = 0x200, scoped, tag = 'prefetched SMEM operand 0']
  %s0 = inlined_call_operand.hbm [shape: s32[2], index: 0, kind: input, shape index: {}]
  %s1 = inlined_call_operand.hbm [shape: f32[2,4,256], index: 1, kind: input, shape index: {}]
  %s2 = inlined_call_operand.hbm [shape: f32[2,8,8], index: 2, kind: input, shape index: {}]
  %s3 = inlined_call_operand.hbm [shape: f32[2,8,256], index: 3, kind: output, shape index: {}]
  %s4 = sld [smem:[#allocation0]]
  $region57: #{tpu_custom_call.1} parent=0
    _
  %s6 = ssub.s32 1, %s4
  %s7 = scalar_select 0, %s6, %s4
  %9 = dma.hbm_to_smem %s0, 16, [#allocation3], [#allocation2]
  %10 = dma.done [#allocation2], 16
  %11 = sfence
  $region1: #{tpu_custom_call.1} parent=0
    #allocation4 [shape = 'u8[4096]{0}', space=vmem, size = 0x1000, scoped, tag = 'input window, operand 1']
    #allocation5 [shape = 's32[2]{0}', space=sflag, size = 0x8, scoped, tag = 'scoped memory for tpu_custom_call.1']
    #allocation6 [shape = 's32[2]{0}', space=sflag, size = 0x8, scoped, tag = 'scoped memory for tpu_custom_call.1']
    #allocation7 [shape = 'u8[8192]{0}', space=vmem, size = 0x2000, scoped, tag = 'input window, operand 2']
    #allocation8 [shape = 's32[2]{0}', space=sflag, size = 0x8, scoped, tag = 'scoped memory for tpu_custom_call.1']
    #allocation9 [shape = 'u8[8192]{0}', space=vmem, size = 0x2000, scoped, tag = 'output window, operand 0']
    %12 = vsyncpa [#allocation5], 0
    %s13 = scalar_lea.sflag [#allocation5], 1
    %14 = vsyncpa %s13, 0
    %15 = vsyncpa [#allocation8], 0
    %s16 = scalar_lea.sflag [#allocation8], 1
    %17 = vsyncpa %s16, 0
    %18 = vsyncpa [#allocation6], 0
    %s19 = scalar_lea.sflag [#allocation6], 1
    %20 = vsyncpa %s19, 0
    loop: start=0, step=1, limit=6
    $region2: #{tpu_custom_call.1} parent=1 // loop_pre_header
      _
    $region3: #{tpu_custom_call.1} parent=1 // loop_header
      %s22 = sphi 0, %s26
      %p23 = scmp.ge.s32.totalorder %s22, 6
      %s29 = sphi 0, %s48
      %s30 = sphi 0, %s44
      %s31 = sphi 0, %s40
      %s32 = sphi 0, %s29
      %s33 = sphi 0, %s30
      %s34 = sphi 0, %s31
      %s35 = sphi 0, %s32
      %s36 = sphi 0, %s33
      %s37 = sphi 0, %s34
      %s53 = sphi 0, %s55
      %s56 = sphi 0, %s53
      %s57 = sphi 0, %s56
      %s73 = sphi 0, %s57
      %s81 = sphi 0, %s83
      %s84 = sphi 0, %s81
      %s85 = sphi 0, %s84
      %s101 = sphi 0, %s85
      %s111 = sphi 0, %s113
      %s114 = sphi 0, %s111
      %s115 = sphi 0, %s114
      %s131 = sphi 0, %s115
    $region4: #{tpu_custom_call.1} parent=1 // loop_header_branch
      %25 = sbr.rel (%p23) target = $region8
    $region5: #{tpu_custom_call.1} parent=1 // loop_body
      %s27 = ssub.s32 %s22, 1
      %s28 = ssub.s32 %s22, 2
      %s38 = sadd.s32 1, %s31
      %p39 = scmp.ge.s32.totalorder %s38, 1
      %s40 = scalar_select %p39, 0, %s38
      %s41 = sadd.s32 1, %s30
      %s42 = scalar_select %p39, %s41, %s30
      %p43 = scmp.ge.s32.totalorder %s42, 2
      %s44 = scalar_select %p43, 0, %s42
      %s45 = sadd.s32 1, %s29
      %s46 = scalar_select %p43, %s45, %s29
      %p47 = scmp.ge.s32.totalorder %s46, 2
      %s48 = scalar_select %p47, 0, %s46
      %s49 = ssub.s32 %s29, %s48
      %s50 = ssub.s32 %s30, %s44
      %s51 = sor.u32 %s49, %s50
      %p52 = scmp.eq.s32.totalorder %s51, 0
      %s54 = sadd.s32 %s53, 1
      %s55 = scalar_select %p52, %s53, %s54
      %p58 = pneg %p52
      %p59 = scmp.eq.s32.totalorder %s22, 3
      %p60 = por %p58, %p59
      %p61 = scmp.ne.s32.totalorder %s53, %s56
      %p62 = scmp.eq.s32.totalorder %s22, 0
      %p63 = por %p61, %p62
      %p64 = scmp.ne.s32.totalorder %s53, %s56
      %p65 = scmp.eq.s32.totalorder %s27, 3
      %p66 = por %p64, %p65
      %p67 = scmp.ne.s32.totalorder %s56, %s57
      %p68 = scmp.eq.s32.totalorder %s27, 0
      %p69 = por %p67, %p68
      %p70 = scmp.ne.s32.totalorder %s56, %s57
      %p71 = scmp.eq.s32.totalorder %s28, 3
      %p72 = por %p70, %p71
      %p74 = scmp.ne.s32.totalorder %s57, %s73
      %p75 = scmp.eq.s32.totalorder %s28, 0
      %p76 = por %p74, %p75
      %s77 = ssub.s32 %s29, %s48
      %s78 = ssub.s32 %s31, %s40
      %s79 = sor.u32 %s77, %s78
      %p80 = scmp.eq.s32.totalorder %s79, 0
      %s82 = sadd.s32 %s81, 1
      %s83 = scalar_select %p80, %s81, %s82
      %p86 = pneg %p80
      %p87 = scmp.eq.s32.totalorder %s22, 3
      %p88 = por %p86, %p87
      %p89 = scmp.ne.s32.totalorder %s81, %s84
      %p90 = scmp.eq.s32.totalorder %s22, 0
      %p91 = por %p89, %p90
      %p92 = scmp.ne.s32.totalorder %s81, %s84
      %p93 = scmp.eq.s32.totalorder %s27, 3
      %p94 = por %p92, %p93
      %p95 = scmp.ne.s32.totalorder %s84, %s85
      %p96 = scmp.eq.s32.totalorder %s27, 0
      %p97 = por %p95, %p96
      %p98 = scmp.ne.s32.totalorder %s84, %s85
      %p99 = scmp.eq.s32.totalorder %s28, 3
      %p100 = por %p98, %p99
      %p102 = scmp.ne.s32.totalorder %s85, %s101
      %p103 = scmp.eq.s32.totalorder %s28, 0
      %p104 = por %p102, %p103
      %s105 = ssub.s32 %s29, %s48
      %s106 = ssub.s32 %s31, %s40
      %s107 = sor.u32 %s105, %s106
      %s108 = ssub.s32 %s30, %s44
      %s109 = sor.u32 %s107, %s108
      %p110 = scmp.eq.s32.totalorder %s109, 0
      %s112 = sadd.s32 %s111, 1
      %s113 = scalar_select %p110, %s111, %s112
      %p116 = pneg %p110
      %p117 = scmp.eq.s32.totalorder %s22, 3
      %p118 = por %p116, %p117
      %p119 = scmp.ne.s32.totalorder %s111, %s114
      %p120 = scmp.eq.s32.totalorder %s22, 0
      %p121 = por %p119, %p120
      %p122 = scmp.ne.s32.totalorder %s111, %s114
      %p123 = scmp.eq.s32.totalorder %s27, 3
      %p124 = por %p122, %p123
      %p125 = scmp.ne.s32.totalorder %s114, %s115
      %p126 = scmp.eq.s32.totalorder %s27, 0
      %p127 = por %p125, %p126
      %p128 = scmp.ne.s32.totalorder %s114, %s115
      %p129 = scmp.eq.s32.totalorder %s28, 3
      %p130 = por %p128, %p129
      %p132 = scmp.ne.s32.totalorder %s115, %s131
      %p133 = scmp.eq.s32.totalorder %s28, 0
      %p134 = por %p132, %p133
      %p135 = scmp.le.s32.totalorder 1, %s22
      %p136 = scmp.lt.s32.totalorder %s22, 5
      %p137 = pnand %p135, %p136
      %p138 = pneg %p137
      // Predicated region
      $region9: #{tpu_custom_call.1} parent=5 // pred_check
        _
      $region10: #{tpu_custom_call.1} parent=5 // pred_check_branch
        %140 = sbr.rel (%p137) target = $region12
      $region11: #{tpu_custom_call.1} parent=5 // pred_region
        %s141 = ssub.s32 %s22, 1
      $region12: #{tpu_custom_call.1} parent=5 // pred_fallthru
        _
      %p142 = scmp.lt.s32.totalorder %s22, 4
      // Predicated region
      $region13: #{tpu_custom_call.1} parent=5 // pred_check
        %p143 = pneg %p142
      $region14: #{tpu_custom_call.1} parent=5 // pred_check_branch
        %145 = sbr.rel (%p143) target = $region16
      $region15: #{tpu_custom_call.1} parent=5 // pred_region
        // Predicated region
        $region17: #{tpu_custom_call.1} parent=15 // pred_check
          %p146 = pneg %p63
        $region18: #{tpu_custom_call.1} parent=15 // pred_check_branch
          %148 = sbr.rel (%p146) target = $region20
        $region19: #{tpu_custom_call.1} parent=15 // pred_region
          %s149 = sand.u32 %s53, 1
          %s150 = scalar_lea.sflag [#allocation5], %s149
          %s151 = sand.u32 %s53, 1
          %s152 = smul.addr %s151, 4
          %s153 = scalar_lea.vmem [#allocation4], %s152
          %s155 = ssub.s32 64, 64
          %156 = vsyncadd %s150, %s155
          %s157 = smul.addr %s29, 2
          %s158 = sadd.s32 %s30, %s157
          %s159 = smul.addr %s158, 64
          %s160 = scalar_lea.hbm %s1, %s159
          %s162 = sshll.u32 %s153, 4
          %s163 = int_to_ptr.vmem [resolvable:$true] %s162
          %165 = dma.hbm_to_vmem [thread:$0]  %s160, 64, %s163, %s150
        $region20: #{tpu_custom_call.1} parent=15 // pred_fallthru
          _
        // Predicated region
        $region21: #{tpu_custom_call.1} parent=15 // pred_check
          %p166 = pneg %p91
        $region22: #{tpu_custom_call.1} parent=15 // pred_check_branch
          %168 = sbr.rel (%p166) target = $region24
        $region23: #{tpu_custom_call.1} parent=15 // pred_region
          %s169 = sand.u32 %s81, 1
          %s170 = scalar_lea.sflag [#allocation8], %s169
          %s171 = sand.u32 %s81, 1
          %s172 = smul.addr %s171, 8
          %s173 = scalar_lea.vmem [#allocation7], %s172
          %s175 = ssub.s32 128, 128
          %176 = vsyncadd %s170, %s175
          %s177 = sadd.s32 %s31, %s29
          %s178 = smul.addr %s177, 128
          %s179 = scalar_lea.hbm %s2, %s178
          %s181 = sshll.u32 %s173, 4
          %s182 = int_to_ptr.vmem [resolvable:$true] %s181
          %184 = dma.hbm_to_vmem [thread:$0]  %s179, 128, %s182, %s170
        $region24: #{tpu_custom_call.1} parent=15 // pred_fallthru
          _
      $region16: #{tpu_custom_call.1} parent=5 // pred_fallthru
        _
      %p185 = scmp.le.s32.totalorder 1, %s22
      %p186 = scmp.lt.s32.totalorder %s22, 5
      %p187 = pnand %p185, %p186
      %p188 = pneg %p187
      // Predicated region
      $region25: #{tpu_custom_call.1} parent=5 // pred_check
        _
      $region26: #{tpu_custom_call.1} parent=5 // pred_check_branch
        %190 = sbr.rel (%p187) target = $region28
      $region27: #{tpu_custom_call.1} parent=5 // pred_region
        %s191 = ssub.s32 %s22, 1
        %s192 = sand.u32 %s56, 1
        %s193 = scalar_lea.sflag [#allocation5], %s192
        %s194 = sand.u32 %s56, 1
        %s195 = smul.addr %s194, 4
        %s196 = scalar_lea.vmem [#allocation4], %s195
        // Predicated region
        $region29: #{tpu_custom_call.1} parent=27 // pred_check
          %p197 = pneg %p69
        $region30: #{tpu_custom_call.1} parent=27 // pred_check_branch
          %199 = sbr.rel (%p197) target = $region32
        $region31: #{tpu_custom_call.1} parent=27 // pred_region
          %200 = dma.done %s193, 64
        $region32: #{tpu_custom_call.1} parent=27 // pred_fallthru
          _
        %s201 = sand.u32 %s84, 1
        %s202 = scalar_lea.sflag [#allocation8], %s201
        %s203 = sand.u32 %s84, 1
        %s204 = smul.addr %s203, 8
        %s205 = scalar_lea.vmem [#allocation7], %s204
        // Predicated region
        $region33: #{tpu_custom_call.1} parent=27 // pred_check
          %p206 = pneg %p97
        $region34: #{tpu_custom_call.1} parent=27 // pred_check_branch
          %208 = sbr.rel (%p206) target = $region36
        $region35: #{tpu_custom_call.1} parent=27 // pred_region
          %209 = dma.done %s202, 128
        $region36: #{tpu_custom_call.1} parent=27 // pred_fallthru
          _
        %s210 = sand.u32 %s56, 1
        %s211 = scalar_lea.sflag [#allocation5], %s210
        %s212 = sand.u32 %s56, 1
        %s213 = smul.addr %s212, 4
        %s214 = scalar_lea.vmem [#allocation4], %s213
        %p215 = pneg %p69
        %p216 = pneg %p66
        %s217 = sand.u32 %s84, 1
        %s218 = scalar_lea.sflag [#allocation8], %s217
        %s219 = sand.u32 %s84, 1
        %s220 = smul.addr %s219, 8
        %s221 = scalar_lea.vmem [#allocation7], %s220
        %p222 = pneg %p97
        %p223 = pneg %p94
        %p224 = pneg %p127
        %p225 = pneg %p124
        %s226 = sand.u32 %s114, 1
        %s227 = scalar_lea.sflag [#allocation6], %s226
        %s228 = sand.u32 %s114, 1
        %s229 = smul.addr %s228, 8
        %s230 = scalar_lea.vmem [#allocation9], %s229
        %s231 = smul.u32 %s34, 8
        %s232 = sld [smem:[#allocation3 + %s32]]
        %p233 = scmp.ge.s32.totalorder %s231, %s232
        // Predicated region
        $region37: #{tpu_custom_call.1} parent=27 // pred_check
          %p234 = pneg %p233
        $region38: #{tpu_custom_call.1} parent=27 // pred_check_branch
          %236 = sbr.rel (%p234) target = $region40
        $region39: #{tpu_custom_call.1} parent=27 // pred_region
          %237 = vst [vmem:[%s230] sm:$0xff] 0.0
        $region40: #{tpu_custom_call.1} parent=27 // pred_fallthru
          _
        %s238 = sld [smem:[#allocation3 + %s32]]
        %p239 = scmp.lt.s32.totalorder %s231, %s238
        // Predicated region
        $region41: #{tpu_custom_call.1} parent=27 // pred_check
          %p240 = pneg %p239
        $region42: #{tpu_custom_call.1} parent=27 // pred_check_branch
          %242 = sbr.rel (%p240) target = $region44
        $region43: #{tpu_custom_call.1} parent=27 // pred_region
          %v243 = vld [vmem:[%s205] sm:$0xff]
          %v244 = vld [vmem:[%s196] sm:$0xf]
          %v245 = vlaneseq
          %v246 = vand.u32 %v245, 127
          %s247 = smul.u32 %s33, 128
          %v248 = vstv %s247
          %v249 = vadd.s32 %v246, %v248
          %v250 = vcvt.s32.f32 %v249
          %v251 = vrcp.pop 16.0
          %v252 = vmul.f32 %v250, %v251
          %v253 = vfloor.f32 %v252
          %v254 = vmul.f32 %v253, 16.0
          %v255 = vsub.f32 %v250, %v254
          %v256 = vmul.f32 %v255, 2.0
          %v257 = vadd.f32 %v256, 1.0
          %v258 = vmul.f32 %v253, 2.0
          %v259 = vadd.f32 %v258, 1.0
          %v260 = vmul.f32 %v244, 80.0
          %v261 = vadd.f32 %v260, %v257
          %v262 = vadd.f32 %v260, %v259
          %v264 = vrot.slane %v261, 6
          %v266 = vsub.f32 %v261, %v264
          %v268 = vrot.slane %v262, 6
          %v270 = vsub.f32 %v262, %v268
          %v271 = vmul.f32 %v266, 0.5
          %v273 = vrot.slane %v271, 2
          %v275 = vadd.f32 %v261, %v273
          %v276 = vmul.f32 %v270, 0.5
          %v278 = vrot.slane %v276, 2
          %v280 = vadd.f32 %v262, %v278
          %v281 = vsub.f32 %v275, %v273
          %v282 = vsub.f32 %v280, %v278
          %v283 = vadd.f32 %v275, %v273
          %v284 = vadd.f32 %v280, %v278
          %v286 = vrot.slane %v270, 1
          %v288 = vmul.f32 %v266, %v286
          %v289 = vlaneseq
          %v290 = vshrl.u32 %v289, 7
          %v291 = vsub.s32 0, %v290
          %v292 = vrot.slane %v281, %v291
          %294 = vset.pattern.permute.xlu0 0
          %295 = vperm.xlu0 %294, %v243
          %v296 = vpop.permute.xlu0 %295
          %v298 = vmax.f32 %v292, %v296
          %v299 = vlaneseq
          %v300 = vshrl.u32 %v299, 7
          %v301 = vsub.s32 1, %v300
          %v302 = vrot.slane %v282, %v301
          %303 = vset.pattern.permute.xlu0 1
          %304 = vperm.xlu0 %303, %v243
          %v305 = vpop.permute.xlu0 %304
          %v307 = vmax.f32 %v302, %v305
          %v308 = vlaneseq
          %v309 = vshrl.u32 %v308, 7
          %v310 = vsub.s32 0, %v309
          %v311 = vrot.slane %v283, %v310
          %312 = vset.pattern.permute.xlu0 2
          %313 = vperm.xlu0 %312, %v243
          %v314 = vpop.permute.xlu0 %313
          %v316 = vmin.f32 %v311, %v314
          %v317 = vlaneseq
          %v318 = vshrl.u32 %v317, 7
          %v319 = vsub.s32 1, %v318
          %v320 = vrot.slane %v284, %v319
          %321 = vset.pattern.permute.xlu0 3
          %322 = vperm.xlu0 %321, %v243
          %v323 = vpop.permute.xlu0 %322
          %v325 = vmin.f32 %v320, %v323
          %v326 = vsub.f32 %v316, %v298
          %v327 = vmax.f32 %v326, 0.0
          %v328 = vsub.f32 %v325, %v307
          %v329 = vmax.f32 %v328, 0.0
          %v330 = vmul.f32 %v327, %v329
          %v331 = vlaneseq
          %v332 = vshrl.u32 %v331, 7
          %v333 = vsub.s32 2, %v332
          %v334 = vrot.slane %v288, %v333
          %335 = vset.pattern.permute.xlu0 4
          %336 = vperm.xlu0 %335, %v243
          %v337 = vpop.permute.xlu0 %336
          %v339 = vadd.f32 %v334, %v337
          %v340 = vsub.f32 %v339, %v330
          %v341 = vmax.f32 %v340, 1e-06
          %v342 = vrcp.pop %v341
          %v343 = vmul.f32 %v330, %v342
          %344 = vst [vmem:[%s230] sm:$0xff] %v343
        $region44: #{tpu_custom_call.1} parent=27 // pred_fallthru
          _
        %s345 = sand.u32 %s114, 1
        %s346 = scalar_lea.sflag [#allocation6], %s345
        %s347 = sand.u32 %s114, 1
        %s348 = smul.addr %s347, 8
        %s349 = scalar_lea.vmem [#allocation9], %s348
        // Predicated region
        $region45: #{tpu_custom_call.1} parent=27 // pred_check
          %p350 = pneg %p124
        $region46: #{tpu_custom_call.1} parent=27 // pred_check_branch
          %352 = sbr.rel (%p350) target = $region48
        $region47: #{tpu_custom_call.1} parent=27 // pred_region
          %s354 = ssub.s32 128, 128
          %355 = vsyncadd %s346, %s354
          %s356 = smul.addr %s34, 2
          %s357 = sadd.s32 %s33, %s356
          %s358 = smul.addr %s32, 2
          %s359 = sadd.s32 %s357, %s358
          %s360 = smul.addr %s359, 128
          %s361 = scalar_lea.hbm %s3, %s360
          %s363 = sshll.u32 %s349, 4
          %s364 = int_to_ptr.vmem [resolvable:$true] %s363
          %366 = dma.vmem_to_hbm [thread:$0]  %s364, 128, %s361, %s346
        $region48: #{tpu_custom_call.1} parent=27 // pred_fallthru
          _
      $region28: #{tpu_custom_call.1} parent=5 // pred_fallthru
        _
      %p367 = scmp.le.s32.totalorder 2, %s22
      // Predicated region
      $region49: #{tpu_custom_call.1} parent=5 // pred_check
        %p368 = pneg %p367
      $region50: #{tpu_custom_call.1} parent=5 // pred_check_branch
        %370 = sbr.rel (%p368) target = $region52
      $region51: #{tpu_custom_call.1} parent=5 // pred_region
        %s371 = ssub.s32 %s22, 2
        // Predicated region
        $region53: #{tpu_custom_call.1} parent=51 // pred_check
          %p372 = pneg %p130
        $region54: #{tpu_custom_call.1} parent=51 // pred_check_branch
          %374 = sbr.rel (%p372) target = $region56
        $region55: #{tpu_custom_call.1} parent=51 // pred_region
          %s375 = sand.u32 %s115, 1
          %s376 = scalar_lea.sflag [#allocation6], %s375
          %s377 = sand.u32 %s115, 1
          %s378 = smul.addr %s377, 8
          %s379 = scalar_lea.vmem [#allocation9], %s378
          %380 = dma.done %s376, 128
        $region56: #{tpu_custom_call.1} parent=51 // pred_fallthru
          _
      $region52: #{tpu_custom_call.1} parent=5 // pred_fallthru
        _
    $region6: #{tpu_custom_call.1} parent=1 // loop_footer
      %s26 = sadd.s32 1, %s22
    $region7: #{tpu_custom_call.1} parent=1 // loop_footer_branch
      %21 = sbr.rel target = $region3
    $region8: #{tpu_custom_call.1} parent=1 // loop_exit
      _
    %381 = vsyncpa [#allocation5], 1
    %s382 = scalar_lea.sflag [#allocation5], 1
    %383 = vsyncpa %s382, 1
    %384 = vsyncpa [#allocation8], 1
    %s385 = scalar_lea.sflag [#allocation8], 1
    %386 = vsyncpa %s385, 1
    %387 = vsyncpa [#allocation6], 1
    %s388 = scalar_lea.sflag [#allocation6], 1
    %389 = vsyncpa %s388, 1

</llo_original>
